<compile_context>
chip_gen: v7x
topology: tpu7x:2x2x1
jax: 0.10.0
libtpu: 0.0.40
codegen_flags: <defaults>
</compile_context>

<pallas_src>
import functools

import jax
import jax.numpy as jnp
from jax.experimental import pallas as pl
from jax.experimental.pallas import tpu as pltpu


def qnet_kernel(obsT_ref, actT_ref, w1o_ref, w1a_ref, b1_ref,
                w2_ref, b2_ref, w3_ref, b3_ref, o_ref):
    """Fused 3-layer MLP with residual.

    All activations are (H, TB): hidden on sublanes, batch on lanes (lane-dense).
    Output block is (1, TB).
    """
    # l1: fused concat -> split matmul:  h1 = relu(W1o @ obsT + W1a @ actT + b1)
    h1 = jnp.dot(w1o_ref[...], obsT_ref[...], preferred_element_type=jnp.float32)
    h1 = h1 + jnp.dot(w1a_ref[...], actT_ref[...], preferred_element_type=jnp.float32)
    h1 = jnp.maximum(h1 + b1_ref[...], 0.0)                    # (H, TB)

    # l2: residual branch  q = h1 + relu(W2 @ h1 + b2)
    h2 = jnp.dot(w2_ref[...], h1, preferred_element_type=jnp.float32) + b2_ref[...]
    q = h1 + jnp.maximum(h2, 0.0)                               # (H, TB)

    # l3: (1,H) @ (H,TB) -> (1,TB). Plain matmul, lane-dense output, SMEM scalar bias.
    out = jnp.dot(w3_ref[...], q, preferred_element_type=jnp.float32) + b3_ref[0]
    o_ref[...] = out.astype(o_ref.dtype)                        # (1, TB)


def _pick_batch_tile(B, max_tile=16384):
    """Single grid step whenever the per-step VMEM footprint is tiny (it is, up to
    TB in the ~16K range); otherwise the largest 128-aligned tile dividing B."""
    if B <= max_tile or B % 128 != 0:
        return B
    tb = max_tile - (max_tile % 128)
    while tb >= 128:
        if B % tb == 0:
            return tb
        tb -= 128
    return B


@functools.partial(jax.jit, static_argnames=("max_batch_tile",))
def qnet_forward(obs, act, params, *, max_batch_tile=16384):
    """Run the fused Pallas kernel. Returns (B, 1) like the PyTorch module."""
    w1_obs, w1_act, b1, w2, b2, w3, b3 = params
    B, n_obs = obs.shape
    _, n_act = act.shape
    H = w1_obs.shape[0]

    # Feature-major activations so batch lands on the lane axis inside the kernel.
    # (In a real TD3 pipeline the replay batch would already be stored this way.)
    obs_t = obs.T                                  # (n_obs, B)
    act_t = act.T                                  # (n_act, B)

    TB = _pick_batch_tile(B, max_batch_tile)
    grid = (B // TB,)

    out_1b = pl.pallas_call(
        qnet_kernel,
        out_shape=jax.ShapeDtypeStruct((1, B), jnp.float32),
        grid=grid,
        in_specs=[
            pl.BlockSpec((n_obs, TB), lambda i: (0, i)),        # obs^T (tiled on lanes)
            pl.BlockSpec((n_act, TB), lambda i: (0, i)),        # act^T
            pl.BlockSpec((H, n_obs), lambda i: (0, 0)),         # W1_obs (VMEM-resident)
            pl.BlockSpec((H, n_act), lambda i: (0, 0)),         # W1_act
            pl.BlockSpec((H, 1),     lambda i: (0, 0)),         # b1
            pl.BlockSpec((H, H),     lambda i: (0, 0)),         # W2
            pl.BlockSpec((H, 1),     lambda i: (0, 0)),         # b2
            pl.BlockSpec((1, H),     lambda i: (0, 0)),         # W3 (row vector)
            pl.BlockSpec(memory_space=pltpu.MemorySpace.SMEM),  # b3 scalar
        ],
        out_specs=pl.BlockSpec((1, TB), lambda i: (0, i)),      # lane-dense output
        compiler_params=pltpu.CompilerParams(
            dimension_semantics=("parallel",),
        ),
    )(obs_t, act_t, w1_obs, w1_act, b1, w2, b2, w3, b3)

    # (1, B) -> (B, 1): same linear element order, metadata-only reshape.
    return out_1b.reshape(B, 1)


def init_params(key, n_obs, n_act, hidden_dim):
    """Deterministic init mimicking nn.Linear's U(-1/sqrt(fan_in), 1/sqrt(fan_in)).

    Weights are kept in PyTorch's (out_features, in_features) layout so the kernel
    computes y = W @ x directly (batch on lanes). W1 is generated for the
    concatenated input then split by columns so the kernel never needs the concat.
    """
    n_in = n_obs + n_act
    keys = jax.random.split(key, 6)

    def uniform(k, shape, fan_in):
        bound = 1.0 / jnp.sqrt(float(fan_in))
        return jax.random.uniform(k, shape, jnp.float32, -bound, bound)

    w1 = uniform(keys[0], (hidden_dim, n_in), n_in)         # (H, n_obs+n_act)
    w1_obs, w1_act = w1[:, :n_obs], w1[:, n_obs:]
    b1 = uniform(keys[1], (hidden_dim, 1), n_in)            # (H, 1)
    w2 = uniform(keys[2], (hidden_dim, hidden_dim), hidden_dim)
    b2 = uniform(keys[3], (hidden_dim, 1), hidden_dim)
    w3 = uniform(keys[4], (1, hidden_dim), hidden_dim)      # l3 weight row vector
    b3 = uniform(keys[5], (1,), hidden_dim)                 # scalar bias (SMEM)
    return (w1_obs, w1_act, b1, w2, b2, w3, b3)


def qnet_reference(obs, act, params):
    """Pure-JAX reference for correctness check."""
    w1_obs, w1_act, b1, w2, b2, w3, b3 = params
    h1 = jnp.maximum(obs @ w1_obs.T + act @ w1_act.T + b1.T, 0.0)
    q = h1 + jnp.maximum(h1 @ w2.T + b2.T, 0.0)
    return q @ w3.T + b3                                     # (B, 1)


if __name__ == "__main__":
    n_obs, n_act, H = 12, 4, 32
    key = jax.random.PRNGKey(0)
    k_obs, k_act, k_params = jax.random.split(key, 3)
    params = init_params(k_params, n_obs, n_act, H)

    # Small-shape check (single block, grid=(1,)).
    B = 8
    obs = jax.random.normal(k_obs, (B, n_obs), jnp.float32)
    act = jax.random.normal(k_act, (B, n_act), jnp.float32)
    out = jax.block_until_ready(qnet_forward(obs, act, params))
    ref = qnet_reference(obs, act, params)
    assert out.shape == (B, 1), out.shape
    assert jnp.allclose(out, ref, atol=1e-5, rtol=1e-5), (out, ref)

    # Training-size batch.
    Bt = 1024
    obs_t = jax.random.normal(k_obs, (Bt, n_obs), jnp.float32)
    act_t = jax.random.normal(k_act, (Bt, n_act), jnp.float32)
    ref_t = qnet_reference(obs_t, act_t, params)

    # Default path: single grid step (whole batch in one lane-dense tile).
    out_t = jax.block_until_ready(qnet_forward(obs_t, act_t, params))
    assert out_t.shape == (Bt, 1), out_t.shape
    assert jnp.allclose(out_t, ref_t, atol=1e-4, rtol=1e-4)

    # Tiled path: exercise the multi-step batch grid (TB=256 -> grid=(4,)).
    out_tiled = jax.block_until_ready(
        qnet_forward(obs_t, act_t, params, max_batch_tile=256))
    assert out_tiled.shape == (Bt, 1), out_tiled.shape
    assert jnp.allclose(out_tiled, ref_t, atol=1e-4, rtol=1e-4)

    print("KERNEL_OK")
</pallas_src>

<mosaic_0001>
module attributes {stable_mosaic.version = 11 : i64} {
  func.func @qnet_kernel(%arg0: i32, %arg1: memref<12x8xf32, #tpu.memory_space<vmem>>, %arg2: memref<4x8xf32, #tpu.memory_space<vmem>>, %arg3: memref<32x12xf32, #tpu.memory_space<vmem>>, %arg4: memref<32x4xf32, #tpu.memory_space<vmem>>, %arg5: memref<32x1xf32, #tpu.memory_space<vmem>>, %arg6: memref<32x32xf32, #tpu.memory_space<vmem>>, %arg7: memref<32x1xf32, #tpu.memory_space<vmem>>, %arg8: memref<1x32xf32, #tpu.memory_space<vmem>>, %arg9: memref<1xf32, #tpu.memory_space<smem>>, %arg10: memref<1x8xf32, #tpu.memory_space<vmem>>) attributes {dimension_semantics = [#tpu.dimension_semantics<parallel>], iteration_bounds = array<i64: 1>, scalar_prefetch = 0 : i64, scratch_operands = 0 : i64, tpu.core_type = #tpu.core_type<tc>, window_params = [{transform_indices = @transform_0, window_bounds = array<i64: 12, 8>}, {transform_indices = @transform_1, window_bounds = array<i64: 4, 8>}, {pipeline_mode = #tpu.pipeline_mode<synchronous>, transform_indices = @transform_2, window_bounds = array<i64: 32, 12>}, {pipeline_mode = #tpu.pipeline_mode<synchronous>, transform_indices = @transform_3, window_bounds = array<i64: 32, 4>}, {pipeline_mode = #tpu.pipeline_mode<synchronous>, transform_indices = @transform_4, window_bounds = array<i64: 32, 1>}, {pipeline_mode = #tpu.pipeline_mode<synchronous>, transform_indices = @transform_5, window_bounds = array<i64: 32, 32>}, {pipeline_mode = #tpu.pipeline_mode<synchronous>, transform_indices = @transform_6, window_bounds = array<i64: 32, 1>}, {pipeline_mode = #tpu.pipeline_mode<synchronous>, transform_indices = @transform_7, window_bounds = array<i64: 1, 32>}, {transform_indices = @transform_8, window_bounds = array<i64: 1>}, {transform_indices = @transform_9, window_bounds = array<i64: 1, 8>}]} {
    %c0 = arith.constant 0 : index
    %c0_0 = arith.constant 0 : index
    %0 = vector.load %arg3[%c0, %c0_0] : memref<32x12xf32, #tpu.memory_space<vmem>>, vector<32x12xf32>
    %c0_1 = arith.constant 0 : index
    %c0_2 = arith.constant 0 : index
    %1 = vector.load %arg1[%c0_1, %c0_2] : memref<12x8xf32, #tpu.memory_space<vmem>>, vector<12x8xf32>
    %cst = arith.constant dense<0.000000e+00> : vector<32x8xf32>
    %2 = tpu.matmul %0, %1, %cst {dimension_numbers = #tpu.dot_dimension_numbers<[1], [0], [0], [1], [0, 0, 1, 1], [], []>} : vector<32x12xf32>, vector<12x8xf32>, vector<32x8xf32> -> vector<32x8xf32>
    %c0_3 = arith.constant 0 : index
    %c0_4 = arith.constant 0 : index
    %3 = vector.load %arg4[%c0_3, %c0_4] : memref<32x4xf32, #tpu.memory_space<vmem>>, vector<32x4xf32>
    %c0_5 = arith.constant 0 : index
    %c0_6 = arith.constant 0 : index
    %4 = vector.load %arg2[%c0_5, %c0_6] : memref<4x8xf32, #tpu.memory_space<vmem>>, vector<4x8xf32>
    %cst_7 = arith.constant dense<0.000000e+00> : vector<32x8xf32>
    %5 = tpu.matmul %3, %4, %cst_7 {dimension_numbers = #tpu.dot_dimension_numbers<[1], [0], [0], [1], [0, 0, 1, 1], [], []>} : vector<32x4xf32>, vector<4x8xf32>, vector<32x8xf32> -> vector<32x8xf32>
    %6 = arith.addf %2, %5 : vector<32x8xf32>
    %c0_8 = arith.constant 0 : index
    %c0_9 = arith.constant 0 : index
    %7 = vector.load %arg5[%c0_8, %c0_9] : memref<32x1xf32, #tpu.memory_space<vmem>>, vector<32x1xf32>
    %8 = vector.broadcast %7 : vector<32x1xf32> to vector<32x8xf32>
    %9 = arith.addf %6, %8 : vector<32x8xf32>
    %cst_10 = arith.constant 0.000000e+00 : f32
    %10 = vector.broadcast %cst_10 : f32 to vector<32x8xf32>
    %11 = arith.maximumf %9, %10 : vector<32x8xf32>
    %c0_11 = arith.constant 0 : index
    %c0_12 = arith.constant 0 : index
    %12 = vector.load %arg6[%c0_11, %c0_12] : memref<32x32xf32, #tpu.memory_space<vmem>>, vector<32x32xf32>
    %cst_13 = arith.constant dense<0.000000e+00> : vector<32x8xf32>
    %13 = tpu.matmul %12, %11, %cst_13 {dimension_numbers = #tpu.dot_dimension_numbers<[1], [0], [0], [1], [0, 0, 1, 1], [], []>} : vector<32x32xf32>, vector<32x8xf32>, vector<32x8xf32> -> vector<32x8xf32>
    %c0_14 = arith.constant 0 : index
    %c0_15 = arith.constant 0 : index
    %14 = vector.load %arg7[%c0_14, %c0_15] : memref<32x1xf32, #tpu.memory_space<vmem>>, vector<32x1xf32>
    %15 = vector.broadcast %14 : vector<32x1xf32> to vector<32x8xf32>
    %16 = arith.addf %13, %15 : vector<32x8xf32>
    %cst_16 = arith.constant 0.000000e+00 : f32
    %17 = vector.broadcast %cst_16 : f32 to vector<32x8xf32>
    %18 = arith.maximumf %16, %17 : vector<32x8xf32>
    %19 = arith.addf %11, %18 : vector<32x8xf32>
    %c0_17 = arith.constant 0 : index
    %c0_18 = arith.constant 0 : index
    %20 = vector.load %arg8[%c0_17, %c0_18] : memref<1x32xf32, #tpu.memory_space<vmem>>, vector<1x32xf32>
    %cst_19 = arith.constant dense<0.000000e+00> : vector<1x8xf32>
    %21 = tpu.matmul %20, %19, %cst_19 {dimension_numbers = #tpu.dot_dimension_numbers<[1], [0], [0], [1], [0, 0, 1, 1], [], []>} : vector<1x32xf32>, vector<32x8xf32>, vector<1x8xf32> -> vector<1x8xf32>
    %c0_20 = arith.constant 0 : index
    %22 = memref.load %arg9[%c0_20] : memref<1xf32, #tpu.memory_space<smem>>
    %23 = vector.broadcast %22 : f32 to vector<1x8xf32>
    %24 = arith.addf %21, %23 : vector<1x8xf32>
    %c0_21 = arith.constant 0 : index
    %c0_22 = arith.constant 0 : index
    %25 = vector.load %arg10[%c0_21, %c0_22] : memref<1x8xf32, #tpu.memory_space<vmem>>, vector<1x8xf32>
    tpu.vector_store %arg10[%c0_21, %c0_22], %24 {strides = array<i32>} : memref<1x8xf32, #tpu.memory_space<vmem>>, vector<1x8xf32>,
    return
  }
  func.func @transform_0(%arg0: i32) -> (i32, i32) {
    %c0_i32 = arith.constant 0 : i32
    %c0_i32_0 = arith.constant 0 : i32
    return %c0_i32, %arg0 : i32, i32
  }
  func.func @transform_1(%arg0: i32) -> (i32, i32) {
    %c0_i32 = arith.constant 0 : i32
    %c0_i32_0 = arith.constant 0 : i32
    return %c0_i32, %arg0 : i32, i32
  }
  func.func @transform_2(%arg0: i32) -> (i32, i32) {
    %c0_i32 = arith.constant 0 : i32
    %c0_i32_0 = arith.constant 0 : i32
    %c0_i32_1 = arith.constant 0 : i32
    return %c0_i32, %c0_i32_0 : i32, i32
  }
  func.func @transform_3(%arg0: i32) -> (i32, i32) {
    %c0_i32 = arith.constant 0 : i32
    %c0_i32_0 = arith.constant 0 : i32
    %c0_i32_1 = arith.constant 0 : i32
    return %c0_i32, %c0_i32_0 : i32, i32
  }
  func.func @transform_4(%arg0: i32) -> (i32, i32) {
    %c0_i32 = arith.constant 0 : i32
    %c0_i32_0 = arith.constant 0 : i32
    %c0_i32_1 = arith.constant 0 : i32
    return %c0_i32, %c0_i32_0 : i32, i32
  }
  func.func @transform_5(%arg0: i32) -> (i32, i32) {
    %c0_i32 = arith.constant 0 : i32
    %c0_i32_0 = arith.constant 0 : i32
    %c0_i32_1 = arith.constant 0 : i32
    return %c0_i32, %c0_i32_0 : i32, i32
  }
  func.func @transform_6(%arg0: i32) -> (i32, i32) {
    %c0_i32 = arith.constant 0 : i32
    %c0_i32_0 = arith.constant 0 : i32
    %c0_i32_1 = arith.constant 0 : i32
    return %c0_i32, %c0_i32_0 : i32, i32
  }
  func.func @transform_7(%arg0: i32) -> (i32, i32) {
    %c0_i32 = arith.constant 0 : i32
    %c0_i32_0 = arith.constant 0 : i32
    %c0_i32_1 = arith.constant 0 : i32
    return %c0_i32, %c0_i32_0 : i32, i32
  }
  func.func @transform_8(%arg0: i32) -> i32 {
    %c0_i32 = arith.constant 0 : i32
    %c0_i32_0 = arith.constant 0 : i32
    return %c0_i32 : i32
  }
  func.func @transform_9(%arg0: i32) -> (i32, i32) {
    %c0_i32 = arith.constant 0 : i32
    %c0_i32_0 = arith.constant 0 : i32
    return %c0_i32, %arg0 : i32, i32
  }
}

</mosaic_0001>

<llo_original>
// kernel: qnet_forward.1
$region0: #{qnet_forward.1}
  #allocation0 [shape = 'u32[]', space=smem, size = 0x4, offset = 0x4, fixed_abs, tag = 'smem constant byte address 0x4 - core index']
  #allocation1 [shape = 'u32[144,128]{1,0:T(1,128)}', space=vmem, size = 0x12000, scoped, tag = 'internal scratch']
  #allocation2 [shape = 'f32[1]{0:T(128)S(6)}', space=smem, size = 0x200, scoped, tag = 'scoped memory for qnet_forward.1']
  %s0 = inlined_call_operand.vmem [shape: f32[12,8], index: 0, kind: input, shape index: {}]
  %s1 = inlined_call_operand.vmem [shape: f32[4,8], index: 1, kind: input, shape index: {}]
  %s2 = inlined_call_operand.vmem [shape: f32[32,12], index: 2, kind: input, shape index: {}]
  %s3 = inlined_call_operand.vmem [shape: f32[32,4], index: 3, kind: input, shape index: {}]
  %s4 = inlined_call_operand.vmem [shape: f32[32,1], index: 4, kind: input, shape index: {}]
  %s5 = inlined_call_operand.vmem [shape: f32[32,32], index: 5, kind: input, shape index: {}]
  %s6 = inlined_call_operand.vmem [shape: f32[32,1], index: 6, kind: input, shape index: {}]
  %s7 = inlined_call_operand.vmem [shape: f32[1,32], index: 7, kind: input, shape index: {}]
  %s8 = inlined_call_operand.<no memory space> [shape: f32[1], index: 8, kind: input, shape index: {}]
  %s9 = inlined_call_operand.hbm [shape: f32[1,8], index: 9, kind: output, shape index: {}]
  %s10 = sld [smem:[#allocation0]]
  $region46: #{qnet_forward.1} parent=0
    _
  %s12 = ssub.s32 1, %s10
  %s13 = scalar_select 0, %s12, %s10
  %14 = sst [smem:[#allocation2]] %s8
  $region1: #{qnet_forward.1} parent=0
    #allocation3 [shape = 'u8[512]{0}', space=vmem, size = 0x400, scoped, tag = 'output window, operand 0, single buffered']
    #allocation4 [shape = 's32[1]{0}', space=sflag, size = 0x4, scoped, tag = 'scoped memory for qnet_forward.1']
    %15 = vsyncpa [#allocation4], 0
    // Predicated region
    $region2: #{qnet_forward.1} parent=1 // pred_check
      _
    $region3: #{qnet_forward.1} parent=1 // pred_check_branch
      %17 = sbr.rel (0) target = $region5
    $region4: #{qnet_forward.1} parent=1 // pred_region
      _
    $region5: #{qnet_forward.1} parent=1 // pred_fallthru
      _
    // Predicated region
    $region6: #{qnet_forward.1} parent=1 // pred_check
      _
    $region7: #{qnet_forward.1} parent=1 // pred_check_branch
      %19 = sbr.rel (0) target = $region9
    $region8: #{qnet_forward.1} parent=1 // pred_region
      _
    $region9: #{qnet_forward.1} parent=1 // pred_fallthru
      _
    // Predicated region
    $region10: #{qnet_forward.1} parent=1 // pred_check
      _
    $region11: #{qnet_forward.1} parent=1 // pred_check_branch
      %21 = sbr.rel (0) target = $region13
    $region12: #{qnet_forward.1} parent=1 // pred_region
      _
    $region13: #{qnet_forward.1} parent=1 // pred_fallthru
      _
    // Predicated region
    $region14: #{qnet_forward.1} parent=1 // pred_check
      _
    $region15: #{qnet_forward.1} parent=1 // pred_check_branch
      %23 = sbr.rel (0) target = $region17
    $region16: #{qnet_forward.1} parent=1 // pred_region
      _
    $region17: #{qnet_forward.1} parent=1 // pred_fallthru
      _
    // Predicated region
    $region18: #{qnet_forward.1} parent=1 // pred_check
      _
    $region19: #{qnet_forward.1} parent=1 // pred_check_branch
      %25 = sbr.rel (0) target = $region21
    $region20: #{qnet_forward.1} parent=1 // pred_region
      _
    $region21: #{qnet_forward.1} parent=1 // pred_fallthru
      _
    // Predicated region
    $region22: #{qnet_forward.1} parent=1 // pred_check
      _
    $region23: #{qnet_forward.1} parent=1 // pred_check_branch
      %27 = sbr.rel (0) target = $region25
    $region24: #{qnet_forward.1} parent=1 // pred_region
      _
    $region25: #{qnet_forward.1} parent=1 // pred_fallthru
      _
    // Predicated region
    $region26: #{qnet_forward.1} parent=1 // pred_check
      _
    $region27: #{qnet_forward.1} parent=1 // pred_check_branch
      %29 = sbr.rel (0) target = $region29
    $region28: #{qnet_forward.1} parent=1 // pred_region
      _
    $region29: #{qnet_forward.1} parent=1 // pred_fallthru
      _
    // Predicated region
    $region30: #{qnet_forward.1} parent=1 // pred_check
      _
    $region31: #{qnet_forward.1} parent=1 // pred_check_branch
      %31 = sbr.rel (0) target = $region33
    $region32: #{qnet_forward.1} parent=1 // pred_region
      _
    $region33: #{qnet_forward.1} parent=1 // pred_fallthru
      _
    // Predicated region
    $region34: #{qnet_forward.1} parent=1 // pred_check
      _
    $region35: #{qnet_forward.1} parent=1 // pred_check_branch
      %33 = sbr.rel (0) target = $region37
    $region36: #{qnet_forward.1} parent=1 // pred_region
      _
    $region37: #{qnet_forward.1} parent=1 // pred_fallthru
      _
    %v34 = vld [vmem:[%s2] sm:$0xff]
    %v35 = vld [vmem:[%s2 + $0x8] sm:$0xff]
    %v36 = vld [vmem:[%s2 + $0x10] sm:$0xff]
    %v37 = vld [vmem:[%s2 + $0x18] sm:$0xff]
    %v38 = vld [vmem:[%s0] sm:$0xff]
    %v39 = vld [vmem:[%s0 + $0x8] sm:$0xf]
    %v40 = vld [vmem:[%s3] sm:$0xff]
    %v41 = vld [vmem:[%s3 + $0x8] sm:$0xff]
    %v42 = vld [vmem:[%s3 + $0x10] sm:$0xff]
    %v43 = vld [vmem:[%s3 + $0x18] sm:$0xff]
    %v44 = vld [vmem:[%s1] sm:$0xf]
    %vm45 = vcmask 31744
    %v47 = vsel %vm45, %v40, 0
    %v50 = vsel %vm45, %v41, 0
    %v53 = vsel %vm45, %v42, 0
    %v56 = vsel %vm45, %v43, 0
    %vm58 = vcmask 1043456
    %v60 = vsel %vm58, %v44, 0
    %62 = vmatprep.subr.mxu0 0.0
    %63 = vmatpush1.msra.mxu0 %v60
    %64 = vmatprep.subr.mxu0 0.0
    %65 = vmatpush1.msra.mxu0 0.0
    %66 = vmatprep.subr.mxu0 0.0
    %67 = vmatpush1.msra.mxu0 0.0
    %68 = vmatprep.subr.mxu0 0.0
    %69 = vmatpush1.msra.mxu0 0.0
    %70 = vmatprep.subr.mxu0 0.0
    %71 = vmatpush1.msra.mxu0 0.0
    %72 = vmatprep.subr.mxu0 0.0
    %73 = vmatpush1.msra.mxu0 0.0
    %74 = vmatprep.subr.mxu0 0.0
    %75 = vmatpush1.msra.mxu0 0.0
    %76 = vmatprep.subr.mxu0 0.0
    %77 = vmatpush1.msra.mxu0 0.0
    %78 = vmatprep.subr.mxu0 0.0
    %79 = vmatpush1.msra.mxu0 0.0
    %80 = vmatprep.subr.mxu0 0.0
    %81 = vmatpush1.msra.mxu0 0.0
    %82 = vmatprep.subr.mxu0 0.0
    %83 = vmatpush1.msra.mxu0 0.0
    %84 = vmatprep.subr.mxu0 0.0
    %85 = vmatpush1.msra.mxu0 0.0
    %86 = vmatprep.subr.mxu0 0.0
    %87 = vmatpush1.msra.mxu0 0.0
    %88 = vmatprep.subr.mxu0 0.0
    %89 = vmatpush1.msra.mxu0 0.0
    %90 = vmatprep.subr.mxu0 0.0
    %91 = vmatpush1.msra.mxu0 0.0
    %92 = vmatprep.subr.mxu0 0.0
    %93 = vmatpush1.msra.mxu0 0.0
    %94 = vmatprep.subr.mxu0 0.0
    %95 = vmatpush1.msra.mxu0 0.0
    %96 = vmatprep.subr.mxu0 0.0
    %97 = vmatpush1.msra.mxu0 0.0
    %98 = vmatprep.subr.mxu0 0.0
    %99 = vmatpush1.msra.mxu0 0.0
    %100 = vmatprep.subr.mxu0 0.0
    %101 = vmatpush1.msra.mxu0 0.0
    %102 = vmatprep.subr.mxu0 0.0
    %103 = vmatpush1.msra.mxu0 0.0
    %104 = vmatprep.subr.mxu0 0.0
    %105 = vmatpush1.msra.mxu0 0.0
    %106 = vmatprep.subr.mxu0 0.0
    %107 = vmatpush1.msra.mxu0 0.0
    %108 = vmatprep.subr.mxu0 0.0
    %109 = vmatpush1.msra.mxu0 0.0
    %110 = vmatprep.subr.mxu0 0.0
    %111 = vmatpush1.msra.mxu0 0.0
    %112 = vmatprep.subr.mxu0 0.0
    %113 = vmatpush1.msra.mxu0 0.0
    %114 = vmatprep.subr.mxu0 0.0
    %115 = vmatpush1.msra.mxu0 0.0
    %116 = vmatprep.subr.mxu0 0.0
    %117 = vmatpush1.msra.mxu0 0.0
    %118 = vmatprep.subr.mxu0 0.0
    %119 = vmatpush1.msra.mxu0 0.0
    %120 = vmatprep.subr.mxu0 0.0
    %121 = vmatpush1.msra.mxu0 0.0
    %122 = vmatprep.subr.mxu0 0.0
    %123 = vmatpush1.msra.mxu0 0.0
    %124 = vmatprep.subr.mxu0 0.0
    %125 = vmatpush1.msra.mxu0 0.0
    %126 = vmatprep.mubr.f32.mxu0 0.0
    %127 = vmatmul.mubr.f32.gmra.mrb[0].mxu0 %v47
    %v128 = vpop.f32.mrb[0].mxu0
    %v129 = vadd.f32 0.0, %v128
    %v130 = vpop.f32.mrb[0].mxu0
    %131 = vmatprep.mubr.f32.mxu0 0.0
    %132 = vmatmul.mubr.f32.gmra.mrb[0].mxu0 %v50
    %v133 = vpop.f32.mrb[0].mxu0
    %v134 = vadd.f32 0.0, %v133
    %v135 = vpop.f32.mrb[0].mxu0
    %136 = vmatprep.mubr.f32.mxu0 0.0
    %137 = vmatmul.mubr.f32.gmra.mrb[0].mxu0 %v53
    %v138 = vpop.f32.mrb[0].mxu0
    %v139 = vadd.f32 0.0, %v138
    %v140 = vpop.f32.mrb[0].mxu0
    %141 = vmatprep.mubr.f32.mxu0 0.0
    %142 = vmatmul.mubr.f32.gmra.mrb[0].mxu0 %v56
    %v143 = vpop.f32.mrb[0].mxu0
    %v144 = vadd.f32 0.0, %v143
    %v145 = vpop.f32.mrb[0].mxu0
    %146 = vdwg.mxu0
    %vm147 = vcmask 97280
    %v149 = vsel %vm147, %v34, 0
    %v152 = vsel %vm147, %v35, 0
    %v155 = vsel %vm147, %v36, 0
    %v158 = vsel %vm147, %v37, 0
    %v161 = vsel %vm58, %v39, 0
    %163 = vmatprep.subr.mxu0 0.0
    %164 = vmatpush1.msra.mxu0 %v38
    %165 = vmatprep.subr.mxu0 0.0
    %166 = vmatpush1.msra.mxu0 %v161
    %167 = vmatprep.subr.mxu0 0.0
    %168 = vmatpush1.msra.mxu0 0.0
    %169 = vmatprep.subr.mxu0 0.0
    %170 = vmatpush1.msra.mxu0 0.0
    %171 = vmatprep.subr.mxu0 0.0
    %172 = vmatpush1.msra.mxu0 0.0
    %173 = vmatprep.subr.mxu0 0.0
    %174 = vmatpush1.msra.mxu0 0.0
    %175 = vmatprep.subr.mxu0 0.0
    %176 = vmatpush1.msra.mxu0 0.0
    %177 = vmatprep.subr.mxu0 0.0
    %178 = vmatpush1.msra.mxu0 0.0
    %179 = vmatprep.subr.mxu0 0.0
    %180 = vmatpush1.msra.mxu0 0.0
    %181 = vmatprep.subr.mxu0 0.0
    %182 = vmatpush1.msra.mxu0 0.0
    %183 = vmatprep.subr.mxu0 0.0
    %184 = vmatpush1.msra.mxu0 0.0
    %185 = vmatprep.subr.mxu0 0.0
    %186 = vmatpush1.msra.mxu0 0.0
    %187 = vmatprep.subr.mxu0 0.0
    %188 = vmatpush1.msra.mxu0 0.0
    %189 = vmatprep.subr.mxu0 0.0
    %190 = vmatpush1.msra.mxu0 0.0
    %191 = vmatprep.subr.mxu0 0.0
    %192 = vmatpush1.msra.mxu0 0.0
    %193 = vmatprep.subr.mxu0 0.0
    %194 = vmatpush1.msra.mxu0 0.0
    %195 = vmatprep.subr.mxu0 0.0
    %196 = vmatpush1.msra.mxu0 0.0
    %197 = vmatprep.subr.mxu0 0.0
    %198 = vmatpush1.msra.mxu0 0.0
    %199 = vmatprep.subr.mxu0 0.0
    %200 = vmatpush1.msra.mxu0 0.0
    %201 = vmatprep.subr.mxu0 0.0
    %202 = vmatpush1.msra.mxu0 0.0
    %203 = vmatprep.subr.mxu0 0.0
    %204 = vmatpush1.msra.mxu0 0.0
    %205 = vmatprep.subr.mxu0 0.0
    %206 = vmatpush1.msra.mxu0 0.0
    %207 = vmatprep.subr.mxu0 0.0
    %208 = vmatpush1.msra.mxu0 0.0
    %209 = vmatprep.subr.mxu0 0.0
    %210 = vmatpush1.msra.mxu0 0.0
    %211 = vmatprep.subr.mxu0 0.0
    %212 = vmatpush1.msra.mxu0 0.0
    %213 = vmatprep.subr.mxu0 0.0
    %214 = vmatpush1.msra.mxu0 0.0
    %215 = vmatprep.subr.mxu0 0.0
    %216 = vmatpush1.msra.mxu0 0.0
    %217 = vmatprep.subr.mxu0 0.0
    %218 = vmatpush1.msra.mxu0 0.0
    %219 = vmatprep.subr.mxu0 0.0
    %220 = vmatpush1.msra.mxu0 0.0
    %221 = vmatprep.subr.mxu0 0.0
    %222 = vmatpush1.msra.mxu0 0.0
    %223 = vmatprep.subr.mxu0 0.0
    %224 = vmatpush1.msra.mxu0 0.0
    %225 = vmatprep.subr.mxu0 0.0
    %226 = vmatpush1.msra.mxu0 0.0
    %227 = vmatprep.mubr.f32.mxu0 0.0
    %228 = vmatmul.mubr.f32.gmra.mrb[0].mxu0 %v149
    %v229 = vpop.f32.mrb[0].mxu0
    %v230 = vadd.f32 %v129, %v229
    %v231 = vpop.f32.mrb[0].mxu0
    %232 = vmatprep.mubr.f32.mxu0 0.0
    %233 = vmatmul.mubr.f32.gmra.mrb[0].mxu0 %v152
    %v234 = vpop.f32.mrb[0].mxu0
    %v235 = vadd.f32 %v134, %v234
    %v236 = vpop.f32.mrb[0].mxu0
    %237 = vmatprep.mubr.f32.mxu0 0.0
    %238 = vmatmul.mubr.f32.gmra.mrb[0].mxu0 %v155
    %v239 = vpop.f32.mrb[0].mxu0
    %v240 = vadd.f32 %v139, %v239
    %v241 = vpop.f32.mrb[0].mxu0
    %242 = vmatprep.mubr.f32.mxu0 0.0
    %243 = vmatmul.mubr.f32.gmra.mrb[0].mxu0 %v158
    %v244 = vpop.f32.mrb[0].mxu0
    %v245 = vadd.f32 %v144, %v244
    %v246 = vpop.f32.mrb[0].mxu0
    %247 = vdwg.mxu0
    %v248 = vld [vmem:[%s4] sm:$0xff]
    %v249 = vld [vmem:[%s4 + $0x8] sm:$0xff]
    %v250 = vld [vmem:[%s4 + $0x10] sm:$0xff]
    %v251 = vld [vmem:[%s4 + $0x18] sm:$0xff]
    %253 = vset.pattern.permute.xlu0 0
    %254 = vperm.xlu0 %253, %v248
    %v255 = vpop.permute.xlu0 %254
    %258 = vset.pattern.permute.xlu0 0
    %259 = vperm.xlu0 %258, %v249
    %v260 = vpop.permute.xlu0 %259
    %263 = vset.pattern.permute.xlu0 0
    %264 = vperm.xlu0 %263, %v250
    %v265 = vpop.permute.xlu0 %264
    %268 = vset.pattern.permute.xlu0 0
    %269 = vperm.xlu0 %268, %v251
    %v270 = vpop.permute.xlu0 %269
    %v272 = vadd.f32 %v230, %v255
    %v273 = vadd.f32 %v235, %v260
    %v274 = vadd.f32 %v240, %v265
    %v275 = vadd.f32 %v245, %v270
    %v276 = vmax.f32 %v272, 0.0
    %v277 = vmax.f32 %v273, 0.0
    %v278 = vmax.f32 %v274, 0.0
    %v279 = vmax.f32 %v275, 0.0
    %v280 = vld [vmem:[%s5] sm:$0xff]
    %v281 = vld [vmem:[%s5 + $0x8] sm:$0xff]
    %v282 = vld [vmem:[%s5 + $0x10] sm:$0xff]
    %v283 = vld [vmem:[%s5 + $0x18] sm:$0xff]
    %v284 = vld [vmem:[%s6] sm:$0xff]
    %v285 = vld [vmem:[%s6 + $0x8] sm:$0xff]
    %v286 = vld [vmem:[%s6 + $0x10] sm:$0xff]
    %v287 = vld [vmem:[%s6 + $0x18] sm:$0xff]
    %289 = vset.pattern.permute.xlu0 0
    %290 = vperm.xlu0 %289, %v284
    %v291 = vpop.permute.xlu0 %290
    %294 = vset.pattern.permute.xlu0 0
    %295 = vperm.xlu0 %294, %v285
    %v296 = vpop.permute.xlu0 %295
    %299 = vset.pattern.permute.xlu0 0
    %300 = vperm.xlu0 %299, %v286
    %v301 = vpop.permute.xlu0 %300
    %304 = vset.pattern.permute.xlu0 0
    %305 = vperm.xlu0 %304, %v287
    %v306 = vpop.permute.xlu0 %305
    %vm308 = vcmask 261120
    %v310 = vsel %vm308, %v280, 0
    %v313 = vsel %vm308, %v281, 0
    %v316 = vsel %vm308, %v282, 0
    %v319 = vsel %vm308, %v283, 0
    %321 = vmatprep.subr.mxu0 0.0
    %322 = vmatpush1.msra.mxu0 %v276
    %323 = vmatprep.subr.mxu0 0.0
    %324 = vmatpush1.msra.mxu0 %v277
    %325 = vmatprep.subr.mxu0 0.0
    %326 = vmatpush1.msra.mxu0 %v278
    %327 = vmatprep.subr.mxu0 0.0
    %328 = vmatpush1.msra.mxu0 %v279
    %329 = vmatprep.subr.mxu0 0.0
    %330 = vmatpush1.msra.mxu0 0.0
    %331 = vmatprep.subr.mxu0 0.0
    %332 = vmatpush1.msra.mxu0 0.0
    %333 = vmatprep.subr.mxu0 0.0
    %334 = vmatpush1.msra.mxu0 0.0
    %335 = vmatprep.subr.mxu0 0.0
    %336 = vmatpush1.msra.mxu0 0.0
    %337 = vmatprep.subr.mxu0 0.0
    %338 = vmatpush1.msra.mxu0 0.0
    %339 = vmatprep.subr.mxu0 0.0
    %340 = vmatpush1.msra.mxu0 0.0
    %341 = vmatprep.subr.mxu0 0.0
    %342 = vmatpush1.msra.mxu0 0.0
    %343 = vmatprep.subr.mxu0 0.0
    %344 = vmatpush1.msra.mxu0 0.0
    %345 = vmatprep.subr.mxu0 0.0
    %346 = vmatpush1.msra.mxu0 0.0
    %347 = vmatprep.subr.mxu0 0.0
    %348 = vmatpush1.msra.mxu0 0.0
    %349 = vmatprep.subr.mxu0 0.0
    %350 = vmatpush1.msra.mxu0 0.0
    %351 = vmatprep.subr.mxu0 0.0
    %352 = vmatpush1.msra.mxu0 0.0
    %353 = vmatprep.subr.mxu0 0.0
    %354 = vmatpush1.msra.mxu0 0.0
    %355 = vmatprep.subr.mxu0 0.0
    %356 = vmatpush1.msra.mxu0 0.0
    %357 = vmatprep.subr.mxu0 0.0
    %358 = vmatpush1.msra.mxu0 0.0
    %359 = vmatprep.subr.mxu0 0.0
    %360 = vmatpush1.msra.mxu0 0.0
    %361 = vmatprep.subr.mxu0 0.0
    %362 = vmatpush1.msra.mxu0 0.0
    %363 = vmatprep.subr.mxu0 0.0
    %364 = vmatpush1.msra.mxu0 0.0
    %365 = vmatprep.subr.mxu0 0.0
    %366 = vmatpush1.msra.mxu0 0.0
    %367 = vmatprep.subr.mxu0 0.0
    %368 = vmatpush1.msra.mxu0 0.0
    %369 = vmatprep.subr.mxu0 0.0
    %370 = vmatpush1.msra.mxu0 0.0
    %371 = vmatprep.subr.mxu0 0.0
    %372 = vmatpush1.msra.mxu0 0.0
    %373 = vmatprep.subr.mxu0 0.0
    %374 = vmatpush1.msra.mxu0 0.0
    %375 = vmatprep.subr.mxu0 0.0
    %376 = vmatpush1.msra.mxu0 0.0
    %377 = vmatprep.subr.mxu0 0.0
    %378 = vmatpush1.msra.mxu0 0.0
    %379 = vmatprep.subr.mxu0 0.0
    %380 = vmatpush1.msra.mxu0 0.0
    %381 = vmatprep.subr.mxu0 0.0
    %382 = vmatpush1.msra.mxu0 0.0
    %383 = vmatprep.subr.mxu0 0.0
    %384 = vmatpush1.msra.mxu0 0.0
    %385 = vmatprep.mubr.f32.mxu0 0.0
    %386 = vmatmul.mubr.f32.gmra.mrb[0].mxu0 %v310
    %v387 = vpop.f32.mrb[0].mxu0
    %v388 = vadd.f32 %v291, %v387
    %v389 = vpop.f32.mrb[0].mxu0
    %390 = vmatprep.mubr.f32.mxu0 0.0
    %391 = vmatmul.mubr.f32.gmra.mrb[0].mxu0 %v313
    %v392 = vpop.f32.mrb[0].mxu0
    %v393 = vadd.f32 %v296, %v392
    %v394 = vpop.f32.mrb[0].mxu0
    %395 = vmatprep.mubr.f32.mxu0 0.0
    %396 = vmatmul.mubr.f32.gmra.mrb[0].mxu0 %v316
    %v397 = vpop.f32.mrb[0].mxu0
    %v398 = vadd.f32 %v301, %v397
    %v399 = vpop.f32.mrb[0].mxu0
    %400 = vmatprep.mubr.f32.mxu0 0.0
    %401 = vmatmul.mubr.f32.gmra.mrb[0].mxu0 %v319
    %v402 = vpop.f32.mrb[0].mxu0
    %v403 = vadd.f32 %v306, %v402
    %v404 = vpop.f32.mrb[0].mxu0
    %405 = vdwg.mxu0
    %v406 = vmax.f32 %v388, 0.0
    %v407 = vmax.f32 %v393, 0.0
    %v408 = vmax.f32 %v398, 0.0
    %v409 = vmax.f32 %v403, 0.0
    %v410 = vadd.f32 %v276, %v406
    %v411 = vadd.f32 %v277, %v407
    %v412 = vadd.f32 %v278, %v408
    %v413 = vadd.f32 %v279, %v409
    %v414 = vld [vmem:[%s7] sm:$0x1]
    %s415 = sld [smem:[#allocation2]]
    %v416 = vstv %s415
    %v418 = vsel %vm308, %v414, 0
    %420 = vmatprep.subr.mxu0 0.0
    %421 = vmatpush1.msra.mxu0 %v410
    %422 = vmatprep.subr.mxu0 0.0
    %423 = vmatpush1.msra.mxu0 %v411
    %424 = vmatprep.subr.mxu0 0.0
    %425 = vmatpush1.msra.mxu0 %v412
    %426 = vmatprep.subr.mxu0 0.0
    %427 = vmatpush1.msra.mxu0 %v413
    %428 = vmatprep.subr.mxu0 0.0
    %429 = vmatpush1.msra.mxu0 0.0
    %430 = vmatprep.subr.mxu0 0.0
    %431 = vmatpush1.msra.mxu0 0.0
    %432 = vmatprep.subr.mxu0 0.0
    %433 = vmatpush1.msra.mxu0 0.0
    %434 = vmatprep.subr.mxu0 0.0
    %435 = vmatpush1.msra.mxu0 0.0
    %436 = vmatprep.subr.mxu0 0.0
    %437 = vmatpush1.msra.mxu0 0.0
    %438 = vmatprep.subr.mxu0 0.0
    %439 = vmatpush1.msra.mxu0 0.0
    %440 = vmatprep.subr.mxu0 0.0
    %441 = vmatpush1.msra.mxu0 0.0
    %442 = vmatprep.subr.mxu0 0.0
    %443 = vmatpush1.msra.mxu0 0.0
    %444 = vmatprep.subr.mxu0 0.0
    %445 = vmatpush1.msra.mxu0 0.0
    %446 = vmatprep.subr.mxu0 0.0
    %447 = vmatpush1.msra.mxu0 0.0
    %448 = vmatprep.subr.mxu0 0.0
    %449 = vmatpush1.msra.mxu0 0.0
    %450 = vmatprep.subr.mxu0 0.0
    %451 = vmatpush1.msra.mxu0 0.0
    %452 = vmatprep.subr.mxu0 0.0
    %453 = vmatpush1.msra.mxu0 0.0
    %454 = vmatprep.subr.mxu0 0.0
    %455 = vmatpush1.msra.mxu0 0.0
    %456 = vmatprep.subr.mxu0 0.0
    %457 = vmatpush1.msra.mxu0 0.0
    %458 = vmatprep.subr.mxu0 0.0
    %459 = vmatpush1.msra.mxu0 0.0
    %460 = vmatprep.subr.mxu0 0.0
    %461 = vmatpush1.msra.mxu0 0.0
    %462 = vmatprep.subr.mxu0 0.0
    %463 = vmatpush1.msra.mxu0 0.0
    %464 = vmatprep.subr.mxu0 0.0
    %465 = vmatpush1.msra.mxu0 0.0
    %466 = vmatprep.subr.mxu0 0.0
    %467 = vmatpush1.msra.mxu0 0.0
    %468 = vmatprep.subr.mxu0 0.0
    %469 = vmatpush1.msra.mxu0 0.0
    %470 = vmatprep.subr.mxu0 0.0
    %471 = vmatpush1.msra.mxu0 0.0
    %472 = vmatprep.subr.mxu0 0.0
    %473 = vmatpush1.msra.mxu0 0.0
    %474 = vmatprep.subr.mxu0 0.0
    %475 = vmatpush1.msra.mxu0 0.0
    %476 = vmatprep.subr.mxu0 0.0
    %477 = vmatpush1.msra.mxu0 0.0
    %478 = vmatprep.subr.mxu0 0.0
    %479 = vmatpush1.msra.mxu0 0.0
    %480 = vmatprep.subr.mxu0 0.0
    %481 = vmatpush1.msra.mxu0 0.0
    %482 = vmatprep.subr.mxu0 0.0
    %483 = vmatpush1.msra.mxu0 0.0
    %484 = vmatprep.mubr.f32.mxu0 0.0
    %485 = vmatmul.mubr.f32.gmra.mrb[0].mxu0 %v418
    %v486 = vpop.f32.mrb[0].mxu0
    %v487 = vadd.f32 %v416, %v486
    %v488 = vpop.f32.mrb[0].mxu0
    %489 = vdwg.mxu0
    %vm490 = vcmask 57344
    %491 = vst.msk [vmem:[#allocation3] sm:$0x1] %vm490, %v487
    // Predicated region
    $region38: #{qnet_forward.1} parent=1 // pred_check
      _
    $region39: #{qnet_forward.1} parent=1 // pred_check_branch
      %493 = sbr.rel (0) target = $region41
    $region40: #{qnet_forward.1} parent=1 // pred_region
      %s495 = ssub.s32 16, 16
      %496 = vsyncadd [#allocation4], %s495
      %s498 = sshll.u32 [#allocation3], 4
      %s499 = int_to_ptr.vmem [resolvable:$true] %s498
      %501 = dma.vmem_to_hbm [thread:$0]  %s499, 16, %s9, [#allocation4]
    $region41: #{qnet_forward.1} parent=1 // pred_fallthru
      _
    // Predicated region
    $region42: #{qnet_forward.1} parent=1 // pred_check
      _
    $region43: #{qnet_forward.1} parent=1 // pred_check_branch
      %503 = sbr.rel (0) target = $region45
    $region44: #{qnet_forward.1} parent=1 // pred_region
      %504 = dma.done [#allocation4], 16
    $region45: #{qnet_forward.1} parent=1 // pred_fallthru
      _
    %505 = vsyncpa [#allocation4], 1

</llo_original>
